<compile_context>
chip_gen: v7x
topology: tpu7x:2x2x1
jax: 0.10.0
libtpu: 0.0.40
codegen_flags: <defaults>
</compile_context>

<pallas_src>
import functools

import jax
import jax.numpy as jnp
from jax.experimental import pallas as pl
from jax.experimental.pallas import tpu as pltpu


def _accuracy_kernel(logits_ref, labels_ref, correct_ref, valid_ref, *, ignore_index):
    # Zero the resident accumulators on the first grid step.
    @pl.when(pl.program_id(0) == 0)
    def _init():
        correct_ref[...] = jnp.zeros_like(correct_ref)
        valid_ref[...] = jnp.zeros_like(valid_ref)

    x = logits_ref[...].astype(jnp.float32)          # [TN, C]  (torch: logits.float())
    labels = labels_ref[...]                         # [TN, 1]  int32

    num_classes = x.shape[-1]

    # argmax(-1) with first-occurrence tie-break:
    #   row max -> mask of maximal positions -> min matching lane index.
    row_max = jnp.max(x, axis=-1, keepdims=True)                      # [TN, 1]
    class_idx = jax.lax.broadcasted_iota(jnp.int32, x.shape, 1)       # [TN, C]
    idx_or_sentinel = jnp.where(x == row_max, class_idx, num_classes)
    preds = jnp.min(idx_or_sentinel, axis=-1, keepdims=True)          # [TN, 1]

    valid = labels != ignore_index                                    # [TN, 1] bool
    correct = jnp.logical_and(preds == labels, valid)                 # [TN, 1] bool

    # Per-tile partial sums, accumulated in f32 into the resident outputs.
    correct_ref[...] += jnp.sum(correct.astype(jnp.float32), keepdims=True)
    valid_ref[...] += jnp.sum(valid.astype(jnp.float32), keepdims=True)


def accuracy_pallas(logits, labels, ignore_index: int = -100, block_rows: int = 512):
    """Fused TPU accuracy: argmax over the last dim, masked compare, ratio."""
    num_classes = logits.shape[-1]
    logits2 = logits.reshape(-1, num_classes)
    labels1 = labels.reshape(-1).astype(jnp.int32)
    n = logits2.shape[0]

    def _round_up(a, b):
        return (a + b - 1) // b * b

    # Batch tile: sublane multiple (8), capped at block_rows (big tiles hide the
    # ~0.35us/step overhead; for small inputs this collapses to a single step).
    tn = min(block_rows, _round_up(n, 8))
    n_pad = _round_up(n, tn)
    if n_pad != n:
        logits2 = jnp.pad(logits2, ((0, n_pad - n), (0, 0)))
        labels1 = jnp.pad(labels1, (0, n_pad - n), constant_values=ignore_index)
    labels2 = labels1.reshape(n_pad, 1)

    grid = (n_pad // tn,)
    kernel = functools.partial(_accuracy_kernel, ignore_index=ignore_index)

    correct, valid = pl.pallas_call(
        kernel,
        out_shape=(
            jax.ShapeDtypeStruct((1, 1), jnp.float32),
            jax.ShapeDtypeStruct((1, 1), jnp.float32),
        ),
        grid_spec=pltpu.PrefetchScalarGridSpec(
            num_scalar_prefetch=0,
            grid=grid,
            in_specs=[
                pl.BlockSpec((tn, num_classes), lambda i: (i, 0)),
                pl.BlockSpec((tn, 1), lambda i: (i, 0)),
            ],
            out_specs=(
                pl.BlockSpec((1, 1), lambda i: (0, 0)),
                pl.BlockSpec((1, 1), lambda i: (0, 0)),
            ),
        ),
        compiler_params=pltpu.CompilerParams(
            # Outputs are resident accumulators across the batch axis.
            dimension_semantics=("arbitrary",),
        ),
    )(logits2, labels2)

    # Same semantics as torch: correct.sum().float() / valid_mask.sum().float()
    return correct[0, 0] / valid[0, 0]


if __name__ == "__main__":
    key = jax.random.PRNGKey(0)
    k1, k2, k3 = jax.random.split(key, 3)

    batch, seq, num_classes = 2, 8, 32
    ignore_index = -100

    logits = jax.random.normal(k1, (batch, seq, num_classes), dtype=jnp.float32)
    labels = jax.random.randint(k2, (batch, seq), 0, num_classes, dtype=jnp.int32)
    # Sprinkle some ignored positions so the mask path is exercised.
    ignore_mask = jax.random.bernoulli(k3, 0.25, (batch, seq))
    labels = jnp.where(ignore_mask, ignore_index, labels)

    acc = accuracy_pallas(logits, labels, ignore_index=ignore_index)
    acc = jax.block_until_ready(acc)

    # Pure-JAX reference (matches the PyTorch module).
    valid = labels != ignore_index
    preds = jnp.argmax(logits.astype(jnp.float32), axis=-1)
    correct = jnp.logical_and(preds == labels, valid)
    ref = correct.sum().astype(jnp.float32) / valid.sum().astype(jnp.float32)

    assert jnp.allclose(acc, ref, atol=1e-6), (float(acc), float(ref))
    print("KERNEL_OK")
</pallas_src>

<mosaic_0001>
module attributes {stable_mosaic.version = 11 : i64} {
  func.func @_accuracy_kernel(%arg0: i32, %arg1: memref<16x32xf32, #tpu.memory_space<vmem>>, %arg2: memref<16x1xi32, #tpu.memory_space<vmem>>, %arg3: memref<1x1xf32, #tpu.memory_space<vmem>>, %arg4: memref<1x1xf32, #tpu.memory_space<vmem>>) attributes {dimension_semantics = [#tpu.dimension_semantics<arbitrary>], iteration_bounds = array<i64: 1>, scalar_prefetch = 0 : i64, scratch_operands = 0 : i64, tpu.core_type = #tpu.core_type<tc>, window_params = [{transform_indices = @transform_0, window_bounds = array<i64: 16, 32>}, {transform_indices = @transform_1, window_bounds = array<i64: 16, 1>}, {pipeline_mode = #tpu.pipeline_mode<synchronous>, transform_indices = @transform_2, window_bounds = array<i64: 1, 1>}, {pipeline_mode = #tpu.pipeline_mode<synchronous>, transform_indices = @transform_3, window_bounds = array<i64: 1, 1>}]} {
    %c0_i32 = arith.constant 0 : i32
    %0 = arith.cmpi eq, %arg0, %c0_i32 : i32
    %1 = arith.extui %0 : i1 to i32
    %c0_i32_0 = arith.constant 0 : i32
    %2 = arith.cmpi ne, %1, %c0_i32_0 : i32
    scf.if %2 {
      %cst_15 = arith.constant 0.000000e+00 : f32
      %38 = vector.broadcast %cst_15 : f32 to vector<1x1xf32>
      %c0_16 = arith.constant 0 : index
      %c0_17 = arith.constant 0 : index
      %39 = vector.load %arg3[%c0_16, %c0_17] : memref<1x1xf32, #tpu.memory_space<vmem>>, vector<1x1xf32>
      tpu.vector_store %arg3[%c0_16, %c0_17], %38 {strides = array<i32>} : memref<1x1xf32, #tpu.memory_space<vmem>>, vector<1x1xf32>,
      %cst_18 = arith.constant 0.000000e+00 : f32
      %40 = vector.broadcast %cst_18 : f32 to vector<1x1xf32>
      %c0_19 = arith.constant 0 : index
      %c0_20 = arith.constant 0 : index
      %41 = vector.load %arg4[%c0_19, %c0_20] : memref<1x1xf32, #tpu.memory_space<vmem>>, vector<1x1xf32>
      tpu.vector_store %arg4[%c0_19, %c0_20], %40 {strides = array<i32>} : memref<1x1xf32, #tpu.memory_space<vmem>>, vector<1x1xf32>,
    } else {
    }
    %c0 = arith.constant 0 : index
    %c0_1 = arith.constant 0 : index
    %3 = vector.load %arg1[%c0, %c0_1] : memref<16x32xf32, #tpu.memory_space<vmem>>, vector<16x32xf32>
    %c0_2 = arith.constant 0 : index
    %c0_3 = arith.constant 0 : index
    %4 = vector.load %arg2[%c0_2, %c0_3] : memref<16x1xi32, #tpu.memory_space<vmem>>, vector<16x1xi32>
    %cst = arith.constant dense<0xFF800000> : vector<16xf32>
    %5 = vector.multi_reduction <maximumf>, %3, %cst [1] : vector<16x32xf32> to vector<16xf32>
    %6 = vector.shape_cast %5 : vector<16xf32> to vector<16x1xf32>
    %7 = tpu.iota {dimensions = array<i32: 1>} : vector<16x32xi32>
    %8 = vector.broadcast %6 : vector<16x1xf32> to vector<16x32xf32>
    %9 = arith.cmpf oeq, %3, %8 : vector<16x32xf32>
    %c32_i32 = arith.constant 32 : i32
    %10 = vector.broadcast %c32_i32 : i32 to vector<16x32xi32>
    %11 = arith.select %9, %7, %10 : vector<16x32xi1>, vector<16x32xi32>
    %cst_4 = arith.constant dense<2147483647> : vector<16xi32>
    %12 = vector.multi_reduction <minsi>, %11, %cst_4 [1] : vector<16x32xi32> to vector<16xi32>
    %13 = vector.shape_cast %12 : vector<16xi32> to vector<16x1xi32>
    %c-100_i32 = arith.constant -100 : i32
    %14 = vector.broadcast %c-100_i32 : i32 to vector<16x1xi32>
    %15 = arith.cmpi ne, %4, %14 : vector<16x1xi32>
    %16 = arith.cmpi eq, %13, %4 : vector<16x1xi32>
    %17 = arith.andi %16, %15 : vector<16x1xi1>
    %c0_5 = arith.constant 0 : index
    %c0_6 = arith.constant 0 : index
    %18 = vector.load %arg3[%c0_5, %c0_6] : memref<1x1xf32, #tpu.memory_space<vmem>>, vector<1x1xf32>
    %19 = arith.extui %17 : vector<16x1xi1> to vector<16x1xi32>
    %20 = arith.sitofp %19 : vector<16x1xi32> to vector<16x1xf32>
    %21 = vector.shape_cast %20 : vector<16x1xf32> to vector<1x16x1xf32>
    %cst_7 = arith.constant dense<0.000000e+00> : vector<1xf32>
    %22 = vector.multi_reduction <add>, %21, %cst_7 [1, 2] : vector<1x16x1xf32> to vector<1xf32>
    %23 = vector.shape_cast %22 : vector<1xf32> to vector<1x1x1xf32>
    %24 = vector.extract %23[0, 0, 0] : f32 from vector<1x1x1xf32>
    %25 = vector.broadcast %24 : f32 to vector<1x1xf32>
    %26 = arith.addf %18, %25 : vector<1x1xf32>
    %c0_8 = arith.constant 0 : index
    %c0_9 = arith.constant 0 : index
    %27 = vector.load %arg3[%c0_8, %c0_9] : memref<1x1xf32, #tpu.memory_space<vmem>>, vector<1x1xf32>
    tpu.vector_store %arg3[%c0_8, %c0_9], %26 {strides = array<i32>} : memref<1x1xf32, #tpu.memory_space<vmem>>, vector<1x1xf32>,
    %c0_10 = arith.constant 0 : index
    %c0_11 = arith.constant 0 : index
    %28 = vector.load %arg4[%c0_10, %c0_11] : memref<1x1xf32, #tpu.memory_space<vmem>>, vector<1x1xf32>
    %29 = arith.extui %15 : vector<16x1xi1> to vector<16x1xi32>
    %30 = arith.sitofp %29 : vector<16x1xi32> to vector<16x1xf32>
    %31 = vector.shape_cast %30 : vector<16x1xf32> to vector<1x16x1xf32>
    %cst_12 = arith.constant dense<0.000000e+00> : vector<1xf32>
    %32 = vector.multi_reduction <add>, %31, %cst_12 [1, 2] : vector<1x16x1xf32> to vector<1xf32>
    %33 = vector.shape_cast %32 : vector<1xf32> to vector<1x1x1xf32>
    %34 = vector.extract %33[0, 0, 0] : f32 from vector<1x1x1xf32>
    %35 = vector.broadcast %34 : f32 to vector<1x1xf32>
    %36 = arith.addf %28, %35 : vector<1x1xf32>
    %c0_13 = arith.constant 0 : index
    %c0_14 = arith.constant 0 : index
    %37 = vector.load %arg4[%c0_13, %c0_14] : memref<1x1xf32, #tpu.memory_space<vmem>>, vector<1x1xf32>
    tpu.vector_store %arg4[%c0_13, %c0_14], %36 {strides = array<i32>} : memref<1x1xf32, #tpu.memory_space<vmem>>, vector<1x1xf32>,
    return
  }
  func.func @transform_0(%arg0: i32) -> (i32, i32) {
    %c0_i32 = arith.constant 0 : i32
    %c0_i32_0 = arith.constant 0 : i32
    return %arg0, %c0_i32 : i32, i32
  }
  func.func @transform_1(%arg0: i32) -> (i32, i32) {
    %c0_i32 = arith.constant 0 : i32
    %c0_i32_0 = arith.constant 0 : i32
    return %arg0, %c0_i32 : i32, i32
  }
  func.func @transform_2(%arg0: i32) -> (i32, i32) {
    %c0_i32 = arith.constant 0 : i32
    %c0_i32_0 = arith.constant 0 : i32
    %c0_i32_1 = arith.constant 0 : i32
    return %c0_i32, %c0_i32_0 : i32, i32
  }
  func.func @transform_3(%arg0: i32) -> (i32, i32) {
    %c0_i32 = arith.constant 0 : i32
    %c0_i32_0 = arith.constant 0 : i32
    %c0_i32_1 = arith.constant 0 : i32
    return %c0_i32, %c0_i32_0 : i32, i32
  }
}

</mosaic_0001>

<llo_original>
// kernel: tpu_custom_call.1
$region0: #{tpu_custom_call.1}
  #allocation0 [shape = 'u32[]', space=smem, size = 0x4, offset = 0x4, fixed_abs, tag = 'smem constant byte address 0x4 - core index']
  #allocation1 [shape = 'u32[144,128]{1,0:T(1,128)}', space=vmem, size = 0x12000, scoped, tag = 'internal scratch']
  %s0 = inlined_call_operand.vmem [shape: f32[16,32], index: 0, kind: input, shape index: {}]
  %s1 = inlined_call_operand.vmem [shape: s32[16,1], index: 1, kind: input, shape index: {}]
  %s2 = inlined_call_operand.hbm [shape: f32[1,1], index: 2, kind: output, shape index: {0}]
  %s3 = inlined_call_operand.hbm [shape: f32[1,1], index: 3, kind: output, shape index: {1}]
  %4 = xla_tuple %s2, %s3
  %s5 = sld [smem:[#allocation0]]
  $region30: #{tpu_custom_call.1} parent=0
    _
  %s7 = ssub.s32 1, %s5
  %s8 = scalar_select 0, %s7, %s5
  $region1: #{tpu_custom_call.1} parent=0
    #allocation2 [shape = 'u8[512]{0}', space=vmem, size = 0x400, scoped, tag = 'output window, operand 0, single buffered']
    #allocation3 [shape = 's32[1]{0}', space=sflag, size = 0x4, scoped, tag = 'scoped memory for tpu_custom_call.1']
    #allocation4 [shape = 'u8[512]{0}', space=vmem, size = 0x400, scoped, tag = 'output window, operand 1, single buffered']
    #allocation5 [shape = 's32[1]{0}', space=sflag, size = 0x4, scoped, tag = 'scoped memory for tpu_custom_call.1']
    %9 = vsyncpa [#allocation3], 0
    %10 = vsyncpa [#allocation5], 0
    // Predicated region
    $region2: #{tpu_custom_call.1} parent=1 // pred_check
      _
    $region3: #{tpu_custom_call.1} parent=1 // pred_check_branch
      %12 = sbr.rel (0) target = $region5
    $region4: #{tpu_custom_call.1} parent=1 // pred_region
      _
    $region5: #{tpu_custom_call.1} parent=1 // pred_fallthru
      _
    // Predicated region
    $region6: #{tpu_custom_call.1} parent=1 // pred_check
      _
    $region7: #{tpu_custom_call.1} parent=1 // pred_check_branch
      %14 = sbr.rel (0) target = $region9
    $region8: #{tpu_custom_call.1} parent=1 // pred_region
      _
    $region9: #{tpu_custom_call.1} parent=1 // pred_fallthru
      _
    %p15 = scmp.eq.s32.totalorder 0, 0
    // Predicated region
    $region10: #{tpu_custom_call.1} parent=1 // pred_check
      %p16 = pneg %p15
    $region11: #{tpu_custom_call.1} parent=1 // pred_check_branch
      %18 = sbr.rel (%p16) target = $region13
    $region12: #{tpu_custom_call.1} parent=1 // pred_region
      %vm19 = vcmask 0
      %20 = vst.msk [vmem:[#allocation2] sm:$0x1] %vm19, 0.0
      %21 = vst.msk [vmem:[#allocation4] sm:$0x1] %vm19, 0.0
    $region13: #{tpu_custom_call.1} parent=1 // pred_fallthru
      _
    %v22 = vld [vmem:[%s0] sm:$0xff]
    %v23 = vld [vmem:[%s0 + $0x8] sm:$0xff]
    %v24 = vld [vmem:[%s1] sm:$0xff]
    %v25 = vld [vmem:[%s1 + $0x8] sm:$0xff]
    %vm26 = vcmask 261120
    %v27 = vsel %vm26, %v22, -inf
    %28 = vmax.xlane.f32.xlu0 %v27
    %v29 = vpop.xlane.xlu0 %28
    %v30 = vsel %vm26, %v23, -inf
    %31 = vmax.xlane.f32.xlu0 %v30
    %v32 = vpop.xlane.xlu0 %31
    %v33 = vlaneseq
    %v34 = vand.u32 %v33, 127
    %vm35 = vcmp.eq.f32.partialorder %v22, %v29
    %vm36 = vcmp.eq.f32.partialorder %v23, %v32
    %v37 = vsel %vm35, %v34, 32
    %v38 = vsel %vm36, %v34, 32
    %v39 = vsel %vm26, %v37, 2147483647
    %v40 = vand.u32 %v39, 65535
    %v41 = vshra.s32 %v39, 16
    %v42 = vcvt.s32.f32 %v40
    %v43 = vcvt.s32.f32 %v41
    %44 = vmin.xlane.f32.xlu0 %v43
    %v45 = vpop.xlane.xlu0 %44
    %vm46 = vcmp.eq.f32.partialorder %v43, %v45
    %v47 = vsel %vm46, %v42, inf
    %48 = vmin.xlane.f32.xlu0 %v47
    %v49 = vpop.xlane.xlu0 %48
    %v50 = vcvt.f32.s32 %v49
    %v51 = vcvt.f32.s32 %v45
    %v52 = vshll.u32 %v51, 16
    %v53 = vadd.s32 %v52, %v50
    %v54 = vsel %vm26, %v38, 2147483647
    %v55 = vand.u32 %v54, 65535
    %v56 = vshra.s32 %v54, 16
    %v57 = vcvt.s32.f32 %v55
    %v58 = vcvt.s32.f32 %v56
    %59 = vmin.xlane.f32.xlu0 %v58
    %v60 = vpop.xlane.xlu0 %59
    %vm61 = vcmp.eq.f32.partialorder %v58, %v60
    %v62 = vsel %vm61, %v57, inf
    %63 = vmin.xlane.f32.xlu0 %v62
    %v64 = vpop.xlane.xlu0 %63
    %v65 = vcvt.f32.s32 %v64
    %v66 = vcvt.f32.s32 %v60
    %v67 = vshll.u32 %v66, 16
    %v68 = vadd.s32 %v67, %v65
    %vm69 = vcmp.ne.s32.totalorder %v24, 4294967196
    %vm70 = vcmp.ne.s32.totalorder %v25, 4294967196
    %vm71 = vcmp.eq.s32.totalorder %v53, %v24
    %vm72 = vcmp.eq.s32.totalorder %v68, %v25
    %vm73 = vmand %vm71, %vm69
    %vm74 = vmand %vm72, %vm70
    %v75 = vld [vmem:[#allocation2] sm:$0x1]
    %v76 = vsel %vm73, 1, 0
    %v77 = vsel %vm74, 1, 0
    %v78 = vcvt.s32.f32 %v76
    %v79 = vcvt.s32.f32 %v77
    %vm80 = vcmask 7168
    %v81 = vsel %vm80, %v78, 0.0
    %v82 = vsel %vm80, %v79, 0.0
    %v83 = vadd.f32 %v81, %v82
    %84 = vadd.xlane.f32.xlu0 %v83
    %v85 = vpop.xlane.xlu0 %84
    %v86 = vrot.slane %v85, 4
    %v87 = vadd.f32 %v85, %v86
    %v88 = vrot.slane %v87, 2
    %v89 = vadd.f32 %v87, %v88
    %v90 = vrot.slane %v89, 1
    %v91 = vadd.f32 %v89, %v90
    %s92 = vtos %v91
    %v93 = vstv %s92
    %v94 = vadd.f32 %v75, %v93
    %vm95 = vcmask 0
    %96 = vst.msk [vmem:[#allocation2] sm:$0x1] %vm95, %v94
    %v97 = vld [vmem:[#allocation4] sm:$0x1]
    %v98 = vsel %vm69, 1, 0
    %v99 = vsel %vm70, 1, 0
    %v100 = vcvt.s32.f32 %v98
    %v101 = vcvt.s32.f32 %v99
    %v102 = vsel %vm80, %v100, 0.0
    %v103 = vsel %vm80, %v101, 0.0
    %v104 = vadd.f32 %v102, %v103
    %105 = vadd.xlane.f32.xlu0 %v104
    %v106 = vpop.xlane.xlu0 %105
    %v107 = vrot.slane %v106, 4
    %v108 = vadd.f32 %v106, %v107
    %v109 = vrot.slane %v108, 2
    %v110 = vadd.f32 %v108, %v109
    %v111 = vrot.slane %v110, 1
    %v112 = vadd.f32 %v110, %v111
    %s113 = vtos %v112
    %v114 = vstv %s113
    %v115 = vadd.f32 %v97, %v114
    %116 = vst.msk [vmem:[#allocation4] sm:$0x1] %vm95, %v115
    // Predicated region
    $region14: #{tpu_custom_call.1} parent=1 // pred_check
      _
    $region15: #{tpu_custom_call.1} parent=1 // pred_check_branch
      %118 = sbr.rel (0) target = $region17
    $region16: #{tpu_custom_call.1} parent=1 // pred_region
      %s120 = ssub.s32 16, 16
      %121 = vsyncadd [#allocation3], %s120
      %s123 = sshll.u32 [#allocation2], 4
      %s124 = int_to_ptr.vmem [resolvable:$true] %s123
      %126 = dma.vmem_to_hbm [thread:$0]  %s124, 16, %s2, [#allocation3]
    $region17: #{tpu_custom_call.1} parent=1 // pred_fallthru
      _
    // Predicated region
    $region18: #{tpu_custom_call.1} parent=1 // pred_check
      _
    $region19: #{tpu_custom_call.1} parent=1 // pred_check_branch
      %128 = sbr.rel (0) target = $region21
    $region20: #{tpu_custom_call.1} parent=1 // pred_region
      %s130 = ssub.s32 16, 16
      %131 = vsyncadd [#allocation5], %s130
      %s133 = sshll.u32 [#allocation4], 4
      %s134 = int_to_ptr.vmem [resolvable:$true] %s133
      %136 = dma.vmem_to_hbm [thread:$0]  %s134, 16, %s3, [#allocation5]
    $region21: #{tpu_custom_call.1} parent=1 // pred_fallthru
      _
    // Predicated region
    $region22: #{tpu_custom_call.1} parent=1 // pred_check
      _
    $region23: #{tpu_custom_call.1} parent=1 // pred_check_branch
      %138 = sbr.rel (0) target = $region25
    $region24: #{tpu_custom_call.1} parent=1 // pred_region
      %139 = dma.done [#allocation3], 16
    $region25: #{tpu_custom_call.1} parent=1 // pred_fallthru
      _
    // Predicated region
    $region26: #{tpu_custom_call.1} parent=1 // pred_check
      _
    $region27: #{tpu_custom_call.1} parent=1 // pred_check_branch
      %141 = sbr.rel (0) target = $region29
    $region28: #{tpu_custom_call.1} parent=1 // pred_region
      %142 = dma.done [#allocation5], 16
    $region29: #{tpu_custom_call.1} parent=1 // pred_fallthru
      _
    %143 = vsyncpa [#allocation3], 1
    %144 = vsyncpa [#allocation5], 1

</llo_original>
